<compile_context>
chip_gen: v7x
topology: tpu7x:2x2x1
jax: 0.10.0
libtpu: 0.0.40
codegen_flags: <defaults>
</compile_context>

<pallas_src>
import functools

import jax
import jax.numpy as jnp
from jax.experimental import pallas as pl
from jax.experimental.pallas import tpu as pltpu


def _round_up(x, m):
    return ((x + m - 1) // m) * m


def _mlp_kernel(x_ref, w1_ref, b1_ref, w2_ref, b2_ref, o_ref):
    # fc1: (TB, K) @ (K, H) — f32 accumulation on the MXU.
    h = jnp.dot(x_ref[...].astype(w1_ref.dtype), w1_ref[...],
                preferred_element_type=jnp.float32)
    # bias + sigmoid in f32; exp/reciprocal route to the EUP slot (VALU stays free).
    h = jax.nn.sigmoid(h + b1_ref[...])
    # fc2: (TB, H) @ (H, C) — cast activations to the weight dtype for the MXU.
    out = jnp.dot(h.astype(w2_ref.dtype), w2_ref[...],
                  preferred_element_type=jnp.float32)
    # Small-C store: masked vst, but the store volume is tiny so this is the cheap option.
    o_ref[...] = (out + b2_ref[...]).astype(o_ref.dtype)


def prepare_params(w1, b1, w2, b2, *, weight_dtype=None):
    """One-time parameter preparation (call once at model init, not per forward).

    Weights are stored (in, out) — the transpose of torch nn.Linear's (out, in) —
    so the kernel computes x @ w + b directly.  `weight_dtype=jnp.bfloat16` is an
    accuracy/perf tradeoff (halves weight HBM traffic; MXU still accumulates f32).
    """
    if weight_dtype is not None:
        w1 = w1.astype(weight_dtype)
        w2 = w2.astype(weight_dtype)
    b1 = jnp.asarray(b1, jnp.float32).reshape(1, -1)
    b2 = jnp.asarray(b2, jnp.float32).reshape(1, -1)
    return w1, b1, w2, b2


def _choose_batch_tiling(B, block_b):
    """Pick (TB, num_tiles) with batch overshoot < 8 rows per tile."""
    num_tiles = pl.cdiv(B, block_b)
    if B >= 16:
        # Guarantee >= 2 grid steps so both TensorCores get work on v7x megacore
        # (measured ~neutral on single-TC v5e/v6e at these tile sizes).
        num_tiles = max(num_tiles, 2)
    tb = _round_up(pl.cdiv(B, num_tiles), 8)
    num_tiles = pl.cdiv(B, tb)
    return tb, num_tiles


@functools.partial(jax.jit, static_argnames=("block_b",))
def classifier_forward(x, w1, b1, w2, b2, *, block_b=1024):
    """x: (B, K); w1: (K, H); b1: (1, H); w2: (H, C); b2: (1, C) (see prepare_params)."""
    B, K = x.shape
    H = w1.shape[1]
    C = w2.shape[1]

    TB, num_tiles = _choose_batch_tiling(B, block_b)
    B_pad = num_tiles * TB

    if B_pad != B:
        # Batch-only padding (< 8 rows per tile); feature dims stay unpadded — the
        # BlockSpec full-dim exception makes K / H / C legal last-axis block sizes.
        x = jnp.pad(x, ((0, B_pad - B), (0, 0)))

    x_bytes = jnp.dtype(x.dtype).itemsize
    w_bytes = jnp.dtype(w1.dtype).itemsize
    cost = pl.CostEstimate(
        flops=2 * B_pad * (K * H + H * C),
        transcendentals=B_pad * H,
        bytes_accessed=(x_bytes * B_pad * K            # streamed activations
                        + w_bytes * (K * H + H * C)    # resident weights
                        + 4 * (H + C)                  # biases
                        + 4 * B_pad * C),              # output writeback
    )

    out = pl.pallas_call(
        _mlp_kernel,
        out_shape=jax.ShapeDtypeStruct((B_pad, C), jnp.float32),
        grid_spec=pltpu.PrefetchScalarGridSpec(
            num_scalar_prefetch=0,
            grid=(num_tiles,),
            in_specs=[
                # streamed per batch tile (double-buffered by the BlockSpec pipeline)
                pl.BlockSpec((TB, K), lambda i: (i, 0)),
                # small weights / biases: resident full-array blocks
                pl.BlockSpec((K, H), lambda i: (0, 0)),
                pl.BlockSpec((1, H), lambda i: (0, 0)),
                pl.BlockSpec((H, C), lambda i: (0, 0)),
                pl.BlockSpec((1, C), lambda i: (0, 0)),
            ],
            out_specs=pl.BlockSpec((TB, C), lambda i: (i, 0)),
        ),
        compiler_params=pltpu.CompilerParams(
            # batch tiles are independent -> shard grid across TensorCores (v7x)
            dimension_semantics=("parallel",),
        ),
        cost_estimate=cost,
    )(x, w1, b1, w2, b2)

    # Slice away padded batch rows (no-op when B_pad == B).
    return out[:B]


def classifier_reference(x, w1, b1, w2, b2):
    h = x @ w1 + b1.reshape(-1)
    h = jax.nn.sigmoid(h)
    return h @ w2 + b2.reshape(-1)


if __name__ == "__main__":
    # Small shapes consistent with the module's forward: fc1(in=16 -> hid=32), fc2(32 -> 4).
    batch = 8
    input_size = 16
    hidden_size = 32
    num_classes = 4

    key = jax.random.PRNGKey(0)
    kx, kw1, kb1, kw2, kb2, kx2 = jax.random.split(key, 6)

    x = jax.random.normal(kx, (batch, input_size), dtype=jnp.float32)
    # Linear weights stored pre-transposed vs torch ((in, out) instead of (out, in)).
    w1 = jax.random.normal(kw1, (input_size, hidden_size), dtype=jnp.float32) * 0.1
    b1 = jax.random.normal(kb1, (hidden_size,), dtype=jnp.float32) * 0.1
    w2 = jax.random.normal(kw2, (hidden_size, num_classes), dtype=jnp.float32) * 0.1
    b2 = jax.random.normal(kb2, (num_classes,), dtype=jnp.float32) * 0.1

    # One-time param prep (outside the per-call hot path).  weight_dtype=jnp.bfloat16
    # is the optional memory-traffic win; left off here to match the f32 reference.
    w1p, b1p, w2p, b2p = prepare_params(w1, b1, w2, b2, weight_dtype=None)

    # Single-tile path (B=8).
    out = classifier_forward(x, w1p, b1p, w2p, b2p)
    jax.block_until_ready(out)
    ref = classifier_reference(x, w1, b1, w2, b2)
    assert out.shape == (batch, num_classes)
    assert jnp.allclose(out, ref, atol=1e-5, rtol=1e-5), "mismatch vs reference (single tile)"

    # Multi-tile + ragged-batch path (B=300 with block_b=128 -> 3 tiles of 104 rows).
    x_big = jax.random.normal(kx2, (300, input_size), dtype=jnp.float32)
    out_big = classifier_forward(x_big, w1p, b1p, w2p, b2p, block_b=128)
    jax.block_until_ready(out_big)
    ref_big = classifier_reference(x_big, w1, b1, w2, b2)
    assert out_big.shape == (300, num_classes)
    assert jnp.allclose(out_big, ref_big, atol=1e-5, rtol=1e-5), "mismatch vs reference (multi tile)"

    print("KERNEL_OK")
</pallas_src>

<mosaic_0001>
module attributes {stable_mosaic.version = 11 : i64} {
  func.func @_mlp_kernel(%arg0: i32, %arg1: memref<8x16xf32, #tpu.memory_space<vmem>>, %arg2: memref<16x32xf32, #tpu.memory_space<vmem>>, %arg3: memref<1x32xf32, #tpu.memory_space<vmem>>, %arg4: memref<32x4xf32, #tpu.memory_space<vmem>>, %arg5: memref<1x4xf32, #tpu.memory_space<vmem>>, %arg6: memref<8x4xf32, #tpu.memory_space<vmem>>) attributes {dimension_semantics = [#tpu.dimension_semantics<parallel>], iteration_bounds = array<i64: 1>, scalar_prefetch = 0 : i64, scratch_operands = 0 : i64, tpu.core_type = #tpu.core_type<tc>, window_params = [{transform_indices = @transform_0, window_bounds = array<i64: 8, 16>}, {pipeline_mode = #tpu.pipeline_mode<synchronous>, transform_indices = @transform_1, window_bounds = array<i64: 16, 32>}, {pipeline_mode = #tpu.pipeline_mode<synchronous>, transform_indices = @transform_2, window_bounds = array<i64: 1, 32>}, {pipeline_mode = #tpu.pipeline_mode<synchronous>, transform_indices = @transform_3, window_bounds = array<i64: 32, 4>}, {pipeline_mode = #tpu.pipeline_mode<synchronous>, transform_indices = @transform_4, window_bounds = array<i64: 1, 4>}, {transform_indices = @transform_5, window_bounds = array<i64: 8, 4>}]} {
    %c0 = arith.constant 0 : index
    %c0_0 = arith.constant 0 : index
    %0 = vector.load %arg1[%c0, %c0_0] : memref<8x16xf32, #tpu.memory_space<vmem>>, vector<8x16xf32>
    %c0_1 = arith.constant 0 : index
    %c0_2 = arith.constant 0 : index
    %1 = vector.load %arg2[%c0_1, %c0_2] : memref<16x32xf32, #tpu.memory_space<vmem>>, vector<16x32xf32>
    %cst = arith.constant dense<0.000000e+00> : vector<8x32xf32>
    %2 = tpu.matmul %0, %1, %cst {dimension_numbers = #tpu.dot_dimension_numbers<[1], [0], [0], [1], [0, 0, 1, 1], [], []>} : vector<8x16xf32>, vector<16x32xf32>, vector<8x32xf32> -> vector<8x32xf32>
    %c0_3 = arith.constant 0 : index
    %c0_4 = arith.constant 0 : index
    %3 = vector.load %arg3[%c0_3, %c0_4] : memref<1x32xf32, #tpu.memory_space<vmem>>, vector<1x32xf32>
    %4 = vector.broadcast %3 : vector<1x32xf32> to vector<8x32xf32>
    %5 = arith.addf %2, %4 : vector<8x32xf32>
    %6 = arith.negf %5 : vector<8x32xf32>
    %7 = math.exp %6 : vector<8x32xf32>
    %cst_5 = arith.constant 1.000000e+00 : f32
    %8 = vector.broadcast %cst_5 : f32 to vector<8x32xf32>
    %9 = arith.addf %8, %7 : vector<8x32xf32>
    %10 = arith.divf %8, %9 : vector<8x32xf32>
    %c0_6 = arith.constant 0 : index
    %c0_7 = arith.constant 0 : index
    %11 = vector.load %arg4[%c0_6, %c0_7] : memref<32x4xf32, #tpu.memory_space<vmem>>, vector<32x4xf32>
    %cst_8 = arith.constant dense<0.000000e+00> : vector<8x4xf32>
    %12 = tpu.matmul %10, %11, %cst_8 {dimension_numbers = #tpu.dot_dimension_numbers<[1], [0], [0], [1], [0, 0, 1, 1], [], []>} : vector<8x32xf32>, vector<32x4xf32>, vector<8x4xf32> -> vector<8x4xf32>
    %c0_9 = arith.constant 0 : index
    %c0_10 = arith.constant 0 : index
    %13 = vector.load %arg5[%c0_9, %c0_10] : memref<1x4xf32, #tpu.memory_space<vmem>>, vector<1x4xf32>
    %14 = vector.broadcast %13 : vector<1x4xf32> to vector<8x4xf32>
    %15 = arith.addf %12, %14 : vector<8x4xf32>
    %c0_11 = arith.constant 0 : index
    %c0_12 = arith.constant 0 : index
    %16 = vector.load %arg6[%c0_11, %c0_12] : memref<8x4xf32, #tpu.memory_space<vmem>>, vector<8x4xf32>
    tpu.vector_store %arg6[%c0_11, %c0_12], %15 {strides = array<i32>} : memref<8x4xf32, #tpu.memory_space<vmem>>, vector<8x4xf32>,
    return
  }
  func.func @transform_0(%arg0: i32) -> (i32, i32) {
    %c0_i32 = arith.constant 0 : i32
    %c0_i32_0 = arith.constant 0 : i32
    return %arg0, %c0_i32 : i32, i32
  }
  func.func @transform_1(%arg0: i32) -> (i32, i32) {
    %c0_i32 = arith.constant 0 : i32
    %c0_i32_0 = arith.constant 0 : i32
    %c0_i32_1 = arith.constant 0 : i32
    return %c0_i32, %c0_i32_0 : i32, i32
  }
  func.func @transform_2(%arg0: i32) -> (i32, i32) {
    %c0_i32 = arith.constant 0 : i32
    %c0_i32_0 = arith.constant 0 : i32
    %c0_i32_1 = arith.constant 0 : i32
    return %c0_i32, %c0_i32_0 : i32, i32
  }
  func.func @transform_3(%arg0: i32) -> (i32, i32) {
    %c0_i32 = arith.constant 0 : i32
    %c0_i32_0 = arith.constant 0 : i32
    %c0_i32_1 = arith.constant 0 : i32
    return %c0_i32, %c0_i32_0 : i32, i32
  }
  func.func @transform_4(%arg0: i32) -> (i32, i32) {
    %c0_i32 = arith.constant 0 : i32
    %c0_i32_0 = arith.constant 0 : i32
    %c0_i32_1 = arith.constant 0 : i32
    return %c0_i32, %c0_i32_0 : i32, i32
  }
  func.func @transform_5(%arg0: i32) -> (i32, i32) {
    %c0_i32 = arith.constant 0 : i32
    %c0_i32_0 = arith.constant 0 : i32
    return %arg0, %c0_i32 : i32, i32
  }
}

</mosaic_0001>

<llo_original>
// kernel: classifier_forward.1
$region0: #{classifier_forward.1}
  #allocation0 [shape = 'u32[]', space=smem, size = 0x4, offset = 0x4, fixed_abs, tag = 'smem constant byte address 0x4 - core index']
  #allocation1 [shape = 'u32[144,128]{1,0:T(1,128)}', space=vmem, size = 0x12000, scoped, tag = 'internal scratch']
  %s0 = inlined_call_operand.vmem [shape: f32[8,16], index: 0, kind: input, shape index: {}]
  %s1 = inlined_call_operand.vmem [shape: f32[16,32], index: 1, kind: input, shape index: {}]
  %s2 = inlined_call_operand.vmem [shape: f32[1,32], index: 2, kind: input, shape index: {}]
  %s3 = inlined_call_operand.vmem [shape: f32[32,4], index: 3, kind: input, shape index: {}]
  %s4 = inlined_call_operand.vmem [shape: f32[1,4], index: 4, kind: input, shape index: {}]
  %s5 = inlined_call_operand.vmem [shape: f32[8,4], index: 5, kind: output, shape index: {}]
  %s6 = sld [smem:[#allocation0]]
  $region30: #{classifier_forward.1} parent=0
    _
  %s8 = ssub.s32 1, %s6
  %s9 = scalar_select 0, %s8, %s6
  // Predicated region
  $region2: #{classifier_forward.1} parent=0 // pred_check
    _
  $region3: #{classifier_forward.1} parent=0 // pred_check_branch
    %11 = sbr.rel (0) target = $region5
  $region4: #{classifier_forward.1} parent=0 // pred_region
    _
  $region5: #{classifier_forward.1} parent=0 // pred_fallthru
    _
  // Predicated region
  $region6: #{classifier_forward.1} parent=0 // pred_check
    _
  $region7: #{classifier_forward.1} parent=0 // pred_check_branch
    %13 = sbr.rel (0) target = $region9
  $region8: #{classifier_forward.1} parent=0 // pred_region
    _
  $region9: #{classifier_forward.1} parent=0 // pred_fallthru
    _
  // Predicated region
  $region10: #{classifier_forward.1} parent=0 // pred_check
    _
  $region11: #{classifier_forward.1} parent=0 // pred_check_branch
    %15 = sbr.rel (0) target = $region13
  $region12: #{classifier_forward.1} parent=0 // pred_region
    _
  $region13: #{classifier_forward.1} parent=0 // pred_fallthru
    _
  // Predicated region
  $region14: #{classifier_forward.1} parent=0 // pred_check
    _
  $region15: #{classifier_forward.1} parent=0 // pred_check_branch
    %17 = sbr.rel (0) target = $region17
  $region16: #{classifier_forward.1} parent=0 // pred_region
    _
  $region17: #{classifier_forward.1} parent=0 // pred_fallthru
    _
  // Predicated region
  $region18: #{classifier_forward.1} parent=0 // pred_check
    _
  $region19: #{classifier_forward.1} parent=0 // pred_check_branch
    %19 = sbr.rel (0) target = $region21
  $region20: #{classifier_forward.1} parent=0 // pred_region
    _
  $region21: #{classifier_forward.1} parent=0 // pred_fallthru
    _
  %v20 = vld [vmem:[%s0] sm:$0xff]
  %v21 = vld [vmem:[%s1] sm:$0xff]
  %v22 = vld [vmem:[%s1 + $0x8] sm:$0xff]
  %v23 = vld [vmem:[%s2] sm:$0x1]
  %v25 = vlaneseq
  %v26 = vshrl.u32 %v25, 7
  %v27 = vsub.s32 0, %v26
  %v28 = vrot.slane %v23, %v27
  %vm30 = vcmask 130048
  %v32 = vsel %vm30, %v20, 0
  %34 = vmatprep.subr.mxu0 0.0
  %35 = vmatpush1.msra.mxu0 %v21
  %36 = vmatprep.subr.mxu0 0.0
  %37 = vmatpush1.msra.mxu0 %v22
  %38 = vmatprep.subr.mxu0 0.0
  %39 = vmatpush1.msra.mxu0 0.0
  %40 = vmatprep.subr.mxu0 0.0
  %41 = vmatpush1.msra.mxu0 0.0
  %42 = vmatprep.subr.mxu0 0.0
  %43 = vmatpush1.msra.mxu0 0.0
  %44 = vmatprep.subr.mxu0 0.0
  %45 = vmatpush1.msra.mxu0 0.0
  %46 = vmatprep.subr.mxu0 0.0
  %47 = vmatpush1.msra.mxu0 0.0
  %48 = vmatprep.subr.mxu0 0.0
  %49 = vmatpush1.msra.mxu0 0.0
  %50 = vmatprep.subr.mxu0 0.0
  %51 = vmatpush1.msra.mxu0 0.0
  %52 = vmatprep.subr.mxu0 0.0
  %53 = vmatpush1.msra.mxu0 0.0
  %54 = vmatprep.subr.mxu0 0.0
  %55 = vmatpush1.msra.mxu0 0.0
  %56 = vmatprep.subr.mxu0 0.0
  %57 = vmatpush1.msra.mxu0 0.0
  %58 = vmatprep.subr.mxu0 0.0
  %59 = vmatpush1.msra.mxu0 0.0
  %60 = vmatprep.subr.mxu0 0.0
  %61 = vmatpush1.msra.mxu0 0.0
  %62 = vmatprep.subr.mxu0 0.0
  %63 = vmatpush1.msra.mxu0 0.0
  %64 = vmatprep.subr.mxu0 0.0
  %65 = vmatpush1.msra.mxu0 0.0
  %66 = vmatprep.subr.mxu0 0.0
  %67 = vmatpush1.msra.mxu0 0.0
  %68 = vmatprep.subr.mxu0 0.0
  %69 = vmatpush1.msra.mxu0 0.0
  %70 = vmatprep.subr.mxu0 0.0
  %71 = vmatpush1.msra.mxu0 0.0
  %72 = vmatprep.subr.mxu0 0.0
  %73 = vmatpush1.msra.mxu0 0.0
  %74 = vmatprep.subr.mxu0 0.0
  %75 = vmatpush1.msra.mxu0 0.0
  %76 = vmatprep.subr.mxu0 0.0
  %77 = vmatpush1.msra.mxu0 0.0
  %78 = vmatprep.subr.mxu0 0.0
  %79 = vmatpush1.msra.mxu0 0.0
  %80 = vmatprep.subr.mxu0 0.0
  %81 = vmatpush1.msra.mxu0 0.0
  %82 = vmatprep.subr.mxu0 0.0
  %83 = vmatpush1.msra.mxu0 0.0
  %84 = vmatprep.subr.mxu0 0.0
  %85 = vmatpush1.msra.mxu0 0.0
  %86 = vmatprep.subr.mxu0 0.0
  %87 = vmatpush1.msra.mxu0 0.0
  %88 = vmatprep.subr.mxu0 0.0
  %89 = vmatpush1.msra.mxu0 0.0
  %90 = vmatprep.subr.mxu0 0.0
  %91 = vmatpush1.msra.mxu0 0.0
  %92 = vmatprep.subr.mxu0 0.0
  %93 = vmatpush1.msra.mxu0 0.0
  %94 = vmatprep.subr.mxu0 0.0
  %95 = vmatpush1.msra.mxu0 0.0
  %96 = vmatprep.subr.mxu0 0.0
  %97 = vmatpush1.msra.mxu0 0.0
  %98 = vmatprep.mubr.f32.mxu0 0.0
  %99 = vmatmul.mubr.f32.gmra.mrb[0].mxu0 %v32
  %v100 = vpop.f32.mrb[0].mxu0
  %v101 = vadd.f32 %v28, %v100
  %v102 = vpop.f32.mrb[0].mxu0
  %103 = vdwg.mxu0
  %v104 = vxor.u32 %v101, 2147483648
  %v105 = vmul.f32 %v104, 1.442695
  %v106 = vpow.pop %v105
  %v107 = vadd.f32 %v106, 1.0
  %v108 = vrcp.pop %v107
  %v109 = vmul.f32 1.0, %v108
  %v110 = vld [vmem:[%s3] sm:$0xff]
  %v111 = vld [vmem:[%s3 + $0x8] sm:$0xff]
  %v112 = vld [vmem:[%s3 + $0x10] sm:$0xff]
  %v113 = vld [vmem:[%s3 + $0x18] sm:$0xff]
  %v114 = vld [vmem:[%s4] sm:$0x1]
  %v116 = vlaneseq
  %v117 = vshrl.u32 %v116, 7
  %v118 = vsub.s32 0, %v117
  %v119 = vrot.slane %v114, %v118
  %vm121 = vcmask 261120
  %v123 = vsel %vm121, %v109, 0
  %125 = vmatprep.subr.mxu0 0.0
  %126 = vmatpush1.msra.mxu0 %v110
  %127 = vmatprep.subr.mxu0 0.0
  %128 = vmatpush1.msra.mxu0 %v111
  %129 = vmatprep.subr.mxu0 0.0
  %130 = vmatpush1.msra.mxu0 %v112
  %131 = vmatprep.subr.mxu0 0.0
  %132 = vmatpush1.msra.mxu0 %v113
  %133 = vmatprep.subr.mxu0 0.0
  %134 = vmatpush1.msra.mxu0 0.0
  %135 = vmatprep.subr.mxu0 0.0
  %136 = vmatpush1.msra.mxu0 0.0
  %137 = vmatprep.subr.mxu0 0.0
  %138 = vmatpush1.msra.mxu0 0.0
  %139 = vmatprep.subr.mxu0 0.0
  %140 = vmatpush1.msra.mxu0 0.0
  %141 = vmatprep.subr.mxu0 0.0
  %142 = vmatpush1.msra.mxu0 0.0
  %143 = vmatprep.subr.mxu0 0.0
  %144 = vmatpush1.msra.mxu0 0.0
  %145 = vmatprep.subr.mxu0 0.0
  %146 = vmatpush1.msra.mxu0 0.0
  %147 = vmatprep.subr.mxu0 0.0
  %148 = vmatpush1.msra.mxu0 0.0
  %149 = vmatprep.subr.mxu0 0.0
  %150 = vmatpush1.msra.mxu0 0.0
  %151 = vmatprep.subr.mxu0 0.0
  %152 = vmatpush1.msra.mxu0 0.0
  %153 = vmatprep.subr.mxu0 0.0
  %154 = vmatpush1.msra.mxu0 0.0
  %155 = vmatprep.subr.mxu0 0.0
  %156 = vmatpush1.msra.mxu0 0.0
  %157 = vmatprep.subr.mxu0 0.0
  %158 = vmatpush1.msra.mxu0 0.0
  %159 = vmatprep.subr.mxu0 0.0
  %160 = vmatpush1.msra.mxu0 0.0
  %161 = vmatprep.subr.mxu0 0.0
  %162 = vmatpush1.msra.mxu0 0.0
  %163 = vmatprep.subr.mxu0 0.0
  %164 = vmatpush1.msra.mxu0 0.0
  %165 = vmatprep.subr.mxu0 0.0
  %166 = vmatpush1.msra.mxu0 0.0
  %167 = vmatprep.subr.mxu0 0.0
  %168 = vmatpush1.msra.mxu0 0.0
  %169 = vmatprep.subr.mxu0 0.0
  %170 = vmatpush1.msra.mxu0 0.0
  %171 = vmatprep.subr.mxu0 0.0
  %172 = vmatpush1.msra.mxu0 0.0
  %173 = vmatprep.subr.mxu0 0.0
  %174 = vmatpush1.msra.mxu0 0.0
  %175 = vmatprep.subr.mxu0 0.0
  %176 = vmatpush1.msra.mxu0 0.0
  %177 = vmatprep.subr.mxu0 0.0
  %178 = vmatpush1.msra.mxu0 0.0
  %179 = vmatprep.subr.mxu0 0.0
  %180 = vmatpush1.msra.mxu0 0.0
  %181 = vmatprep.subr.mxu0 0.0
  %182 = vmatpush1.msra.mxu0 0.0
  %183 = vmatprep.subr.mxu0 0.0
  %184 = vmatpush1.msra.mxu0 0.0
  %185 = vmatprep.subr.mxu0 0.0
  %186 = vmatpush1.msra.mxu0 0.0
  %187 = vmatprep.subr.mxu0 0.0
  %188 = vmatpush1.msra.mxu0 0.0
  %189 = vmatprep.mubr.f32.mxu0 0.0
  %190 = vmatmul.mubr.f32.gmra.mrb[0].mxu0 %v123
  %v191 = vpop.f32.mrb[0].mxu0
  %v192 = vadd.f32 %v119, %v191
  %v193 = vpop.f32.mrb[0].mxu0
  %194 = vdwg.mxu0
  %vm195 = vcmask 31744
  %196 = vst.msk [vmem:[%s5] sm:$0xff] %vm195, %v192
  // Predicated region
  $region22: #{classifier_forward.1} parent=0 // pred_check
    _
  $region23: #{classifier_forward.1} parent=0 // pred_check_branch
    %198 = sbr.rel (0) target = $region25
  $region24: #{classifier_forward.1} parent=0 // pred_region
    _
  $region25: #{classifier_forward.1} parent=0 // pred_fallthru
    _
  // Predicated region
  $region26: #{classifier_forward.1} parent=0 // pred_check
    _
  $region27: #{classifier_forward.1} parent=0 // pred_check_branch
    %200 = sbr.rel (0) target = $region29
  $region28: #{classifier_forward.1} parent=0 // pred_region
    _
  $region29: #{classifier_forward.1} parent=0 // pred_fallthru
    _

</llo_original>
